<compile_context>
chip_gen: v5e
topology: v5e:2x2
jax: 0.10.0
libtpu: 0.0.40
codegen_flags: <defaults>
</compile_context>

<pallas_src>
import jax
import jax.numpy as jnp
from jax.experimental import pallas as pl
from jax.experimental.pallas import tpu as pltpu

_TB_MAX = 1024   # batch-tile cap: keeps double-buffered tiles + f32 intermediates
                 # well under v5e's 16 MiB scoped-VMEM default.


def _round_up(n, m):
    return -(-n // m) * m


def _round_down(n, m):
    return (n // m) * m


# ----------------------------- Pallas kernel -------------------------------
def dann_kernel(x_ref, w1_ref, b1_ref, w2_ref, b2_ref,
                wc1_ref, bc1_ref, wc2_ref, bc2_ref,
                wd1_ref, bd1_ref, wd2_ref, bd2_ref,
                class_ref, domain_ref, feat_ref):
    w1 = w1_ref[...]
    mm = w1.dtype                                     # matmul dtype (bf16)
    x = x_ref[...].astype(mm)                         # (TB, in_dim) cast in VMEM

    # ---- feature extractor (BN folded into the Linears; Dropout == identity)
    h1 = jnp.dot(x, w1, preferred_element_type=jnp.float32) + b1_ref[...]
    h1 = jnp.maximum(h1, 0.0)                         # (TB, 128) f32
    feat = jnp.dot(h1.astype(mm), w2_ref[...],
                   preferred_element_type=jnp.float32) + b2_ref[...]
    feat = jnp.maximum(feat, 0.0)                     # (TB, 64) f32
    feat_ref[...] = feat.astype(feat_ref.dtype)

    fb = feat.astype(mm)

    # ---- class classifier head
    hc = jnp.dot(fb, wc1_ref[...], preferred_element_type=jnp.float32) + bc1_ref[...]
    hc = jnp.maximum(hc, 0.0)                         # (TB, 32) f32
    cls = jnp.dot(hc.astype(mm), wc2_ref[...],
                  preferred_element_type=jnp.float32) + bc2_ref[...]
    class_ref[...] = cls.astype(class_ref.dtype)      # (TB, 2)

    # ---- domain classifier head (ReverseLayerF.forward is identity)
    hd = jnp.dot(fb, wd1_ref[...], preferred_element_type=jnp.float32) + bd1_ref[...]
    hd = jnp.maximum(hd, 0.0)                         # (TB, 32) f32
    dlogits = jnp.dot(hd.astype(mm), wd2_ref[...],
                      preferred_element_type=jnp.float32) + bd2_ref[...]   # (TB, nd)
    # LogSoftmax(dim=1) over exactly the num_domains columns (no lane masking).
    m = jnp.max(dlogits, axis=-1, keepdims=True)
    lse = jnp.log(jnp.sum(jnp.exp(dlogits - m), axis=-1, keepdims=True)) + m
    domain_ref[...] = (dlogits - lse).astype(domain_ref.dtype)


# ---------------------- param folding ---------------------------------------
def _fold_linear_bn(w, b, s, t):
    # Linear (in,out) followed by eval-mode BN (scale s, shift t) == Linear with
    # W' = W * s, b' = b * s + t.
    return w * s, b * s + t


def _prepare_operands(params, matmul_dtype):
    w1, b1 = _fold_linear_bn(params["w1"], params["b1"], params["s1"], params["t1"])
    w2, b2 = _fold_linear_bn(params["w2"], params["b2"], params["s2"], params["t2"])
    wc1, bc1 = _fold_linear_bn(params["wc1"], params["bc1"], params["sc1"], params["tc1"])
    wd1, bd1 = _fold_linear_bn(params["wd1"], params["bd1"], params["sd1"], params["td1"])
    c = lambda a: a.astype(matmul_dtype)
    return (c(w1), b1, c(w2), b2,
            c(wc1), bc1, c(params["wc2"]), params["bc2"],
            c(wd1), bd1, c(params["wd2"]), params["bd2"])


# ---------------------- adaptive batch tile ----------------------------------
def _pick_tb(rows, in_dim):
    """Batch tile: multiple of 16 that never exceeds `rows` (blocks never
    outgrow the array), capped so the double-buffered x tile stays ~2 MiB, and
    split so large batches yield >=2 grid steps (only the parallel batch axis
    shards across v7x's two TensorCores)."""
    cap = min(_TB_MAX, max(16, _round_down((2 << 20) // (in_dim * 4), 16)))
    tile = max(16, min(cap, _round_down(rows, 16)))
    if rows <= 2 * cap:
        half = _round_up(-(-rows // 2), 16)           # ~2 tiles when possible
        tile = max(16, min(tile, half))
    return tile


# ------------------------------ wrapper -------------------------------------
def dann_forward(x, params, alpha=1.0, *, tb=None,
                 matmul_dtype=jnp.bfloat16, feature_dtype=jnp.bfloat16):
    """Fused DANN forward.  Returns (class_output, domain_output, feature).

    `feature` is emitted in `feature_dtype` (bf16 by default: halves the
    dominant output writeback); pass jnp.float32 for exact f32 parity.
    If `tb` is given it must be a multiple of 16 and <= max(B, 16).
    """
    del alpha  # alpha only scales ReverseLayerF gradients; forward is identity
    B, in_dim = x.shape
    num_domains = params["wd2"].shape[1]

    # Tiny batches: pad to one 16-row tile (<=15 extra rows).  Larger batches
    # run unpadded; Pallas masks the ragged edge tile.
    b_rows = max(B, 16)
    x_in = x if b_rows == B else jnp.pad(x, ((0, b_rows - B), (0, 0)))

    if tb is None:
        tb = _pick_tb(b_rows, in_dim)
    num_tiles = pl.cdiv(b_rows, tb)

    ops = _prepare_operands(params, matmul_dtype)

    # Weights/biases stay VMEM-resident via constant index maps.
    # (Single-buffering them via pl.Buffered(1) was considered (review, v7x)
    #  but skipped: VMEM use is already tiny and double-buffering is the safe
    #  default.)
    const = lambda a: pl.BlockSpec(a.shape, lambda i: (0, 0))
    row = lambda w: pl.BlockSpec((tb, w), lambda i: (i, 0))
    in_specs = [row(in_dim)] + [const(a) for a in ops]
    out_specs = (row(2), row(num_domains), row(64))
    out_shape = (jax.ShapeDtypeStruct((b_rows, 2), jnp.float32),
                 jax.ShapeDtypeStruct((b_rows, num_domains), jnp.float32),
                 jax.ShapeDtypeStruct((b_rows, 64), feature_dtype))

    nbytes = lambda a: a.size * a.dtype.itemsize
    feat_bytes = 64 * jnp.dtype(feature_dtype).itemsize
    cost = pl.CostEstimate(
        flops=2 * b_rows * (in_dim * 128 + 128 * 64 + 2 * 64 * 32
                            + 32 * (2 + num_domains)),
        transcendentals=b_rows * (num_domains + 1),
        bytes_accessed=(b_rows * in_dim * 4 + sum(nbytes(a) for a in ops)
                        + b_rows * ((2 + num_domains) * 4 + feat_bytes)),
    )

    class_out, domain_out, feature = pl.pallas_call(
        dann_kernel,
        grid=(num_tiles,),
        in_specs=in_specs,
        out_specs=out_specs,
        out_shape=out_shape,
        compiler_params=pltpu.CompilerParams(dimension_semantics=("parallel",)),
        cost_estimate=cost,
    )(x_in, *ops)

    if b_rows != B:   # only for B < 16; trim the (tiny) pad rows
        class_out, domain_out, feature = class_out[:B], domain_out[:B], feature[:B]
    return class_out, domain_out, feature


# ---------------------- pure-JAX reference (same math) ----------------------
def reference_forward(x, params, *, matmul_dtype=jnp.bfloat16):
    (w1, b1, w2, b2, wc1, bc1, wc2, bc2,
     wd1, bd1, wd2, bd2) = _prepare_operands(params, matmul_dtype)
    xb = x.astype(matmul_dtype)
    h1 = jnp.maximum(jnp.dot(xb, w1, preferred_element_type=jnp.float32) + b1, 0.0)
    feat = jnp.maximum(
        jnp.dot(h1.astype(matmul_dtype), w2, preferred_element_type=jnp.float32) + b2, 0.0)
    fb = feat.astype(matmul_dtype)
    hc = jnp.maximum(jnp.dot(fb, wc1, preferred_element_type=jnp.float32) + bc1, 0.0)
    cls = jnp.dot(hc.astype(matmul_dtype), wc2, preferred_element_type=jnp.float32) + bc2
    hd = jnp.maximum(jnp.dot(fb, wd1, preferred_element_type=jnp.float32) + bd1, 0.0)
    dl = jnp.dot(hd.astype(matmul_dtype), wd2, preferred_element_type=jnp.float32) + bd2
    dl = dl - jax.nn.logsumexp(dl, axis=-1, keepdims=True)
    return cls, dl, feat


# ------------------------- deterministic params ------------------------------
def init_params(key, input_dim, num_domains):
    keys = iter(jax.random.split(key, 16))

    def linear(fan_in, fan_out):
        kw, kb = jax.random.split(next(keys))
        bound = 1.0 / jnp.sqrt(jnp.float32(fan_in))
        w = jax.random.uniform(kw, (fan_in, fan_out), jnp.float32, -bound, bound)
        b = jax.random.uniform(kb, (1, fan_out), jnp.float32, -bound, bound)
        return w, b

    def batchnorm(n, eps=1e-5):
        kg, kb, km, kv = jax.random.split(next(keys), 4)
        gamma = 1.0 + 0.1 * jax.random.normal(kg, (1, n), jnp.float32)
        beta = 0.1 * jax.random.normal(kb, (1, n), jnp.float32)
        mean = 0.1 * jax.random.normal(km, (1, n), jnp.float32)
        var = jnp.abs(jax.random.normal(kv, (1, n), jnp.float32)) + 0.5
        scale = gamma / jnp.sqrt(var + eps)     # eval-mode BN folded to scale/shift
        shift = beta - mean * scale
        return scale, shift

    p = {}
    p["w1"], p["b1"] = linear(input_dim, 128)
    p["s1"], p["t1"] = batchnorm(128)
    p["w2"], p["b2"] = linear(128, 64)
    p["s2"], p["t2"] = batchnorm(64)
    p["wc1"], p["bc1"] = linear(64, 32)
    p["sc1"], p["tc1"] = batchnorm(32)
    p["wc2"], p["bc2"] = linear(32, 2)
    p["wd1"], p["bd1"] = linear(64, 32)
    p["sd1"], p["td1"] = batchnorm(32)
    p["wd2"], p["bd2"] = linear(32, num_domains)
    return p


if __name__ == "__main__":
    key = jax.random.PRNGKey(0)
    k_x, k_p = jax.random.split(key)

    batch = 16
    input_dim = 32          # X_train.shape[1] stand-in
    num_domains = 4         # len(['TNG100','TNG50','Eagle100']) + 1

    x = jax.random.normal(k_x, (batch, input_dim), jnp.float32)
    params = init_params(k_p, input_dim, num_domains)

    class_out, domain_out, feature = jax.block_until_ready(
        jax.jit(dann_forward)(x, params)
    )

    assert class_out.shape == (batch, 2)
    assert domain_out.shape == (batch, num_domains)
    assert feature.shape == (batch, 64)
    # domain output is a log-softmax: rows must sum (in prob space) to 1
    assert jnp.allclose(jnp.sum(jnp.exp(domain_out), axis=1), 1.0, atol=1e-4)

    # compare against a pure-JAX reference built from the same folded operands
    ref_c, ref_d, ref_f = reference_forward(x, params)
    assert jnp.allclose(class_out, ref_c, atol=1e-2, rtol=1e-2)
    assert jnp.allclose(domain_out, ref_d, atol=1e-2, rtol=1e-2)
    assert jnp.allclose(feature.astype(jnp.float32), ref_f, atol=3e-2, rtol=3e-2)

    print("KERNEL_OK")
</pallas_src>

<mosaic_0001>
module attributes {stable_mosaic.version = 11 : i64} {
  func.func @dann_kernel(%arg0: i32, %arg1: memref<16x32xf32, #tpu.memory_space<vmem>>, %arg2: memref<32x128xbf16, #tpu.memory_space<vmem>>, %arg3: memref<1x128xf32, #tpu.memory_space<vmem>>, %arg4: memref<128x64xbf16, #tpu.memory_space<vmem>>, %arg5: memref<1x64xf32, #tpu.memory_space<vmem>>, %arg6: memref<64x32xbf16, #tpu.memory_space<vmem>>, %arg7: memref<1x32xf32, #tpu.memory_space<vmem>>, %arg8: memref<32x2xbf16, #tpu.memory_space<vmem>>, %arg9: memref<1x2xf32, #tpu.memory_space<vmem>>, %arg10: memref<64x32xbf16, #tpu.memory_space<vmem>>, %arg11: memref<1x32xf32, #tpu.memory_space<vmem>>, %arg12: memref<32x4xbf16, #tpu.memory_space<vmem>>, %arg13: memref<1x4xf32, #tpu.memory_space<vmem>>, %arg14: memref<16x2xf32, #tpu.memory_space<vmem>>, %arg15: memref<16x4xf32, #tpu.memory_space<vmem>>, %arg16: memref<16x64xbf16, #tpu.memory_space<vmem>>) attributes {dimension_semantics = [#tpu.dimension_semantics<parallel>], iteration_bounds = array<i64: 1>, scalar_prefetch = 0 : i64, scratch_operands = 0 : i64, tpu.core_type = #tpu.core_type<tc>, window_params = [{transform_indices = @transform_0, window_bounds = array<i64: 16, 32>}, {pipeline_mode = #tpu.pipeline_mode<synchronous>, transform_indices = @transform_1, window_bounds = array<i64: 32, 128>}, {pipeline_mode = #tpu.pipeline_mode<synchronous>, transform_indices = @transform_2, window_bounds = array<i64: 1, 128>}, {pipeline_mode = #tpu.pipeline_mode<synchronous>, transform_indices = @transform_3, window_bounds = array<i64: 128, 64>}, {pipeline_mode = #tpu.pipeline_mode<synchronous>, transform_indices = @transform_4, window_bounds = array<i64: 1, 64>}, {pipeline_mode = #tpu.pipeline_mode<synchronous>, transform_indices = @transform_5, window_bounds = array<i64: 64, 32>}, {pipeline_mode = #tpu.pipeline_mode<synchronous>, transform_indices = @transform_6, window_bounds = array<i64: 1, 32>}, {pipeline_mode = #tpu.pipeline_mode<synchronous>, transform_indices = @transform_7, window_bounds = array<i64: 32, 2>}, {pipeline_mode = #tpu.pipeline_mode<synchronous>, transform_indices = @transform_8, window_bounds = array<i64: 1, 2>}, {pipeline_mode = #tpu.pipeline_mode<synchronous>, transform_indices = @transform_9, window_bounds = array<i64: 64, 32>}, {pipeline_mode = #tpu.pipeline_mode<synchronous>, transform_indices = @transform_10, window_bounds = array<i64: 1, 32>}, {pipeline_mode = #tpu.pipeline_mode<synchronous>, transform_indices = @transform_11, window_bounds = array<i64: 32, 4>}, {pipeline_mode = #tpu.pipeline_mode<synchronous>, transform_indices = @transform_12, window_bounds = array<i64: 1, 4>}, {transform_indices = @transform_13, window_bounds = array<i64: 16, 2>}, {transform_indices = @transform_14, window_bounds = array<i64: 16, 4>}, {transform_indices = @transform_15, window_bounds = array<i64: 16, 64>}]} {
    %c0 = arith.constant 0 : index
    %c0_0 = arith.constant 0 : index
    %0 = vector.load %arg2[%c0, %c0_0] : memref<32x128xbf16, #tpu.memory_space<vmem>>, vector<32x128xbf16>
    %c0_1 = arith.constant 0 : index
    %c0_2 = arith.constant 0 : index
    %1 = vector.load %arg1[%c0_1, %c0_2] : memref<16x32xf32, #tpu.memory_space<vmem>>, vector<16x32xf32>
    %2 = arith.truncf %1 : vector<16x32xf32> to vector<16x32xbf16>
    %cst = arith.constant dense<0.000000e+00> : vector<16x128xf32>
    %3 = tpu.matmul %2, %0, %cst {dimension_numbers = #tpu.dot_dimension_numbers<[1], [0], [0], [1], [0, 0, 1, 1], [], []>} : vector<16x32xbf16>, vector<32x128xbf16>, vector<16x128xf32> -> vector<16x128xf32>
    %c0_3 = arith.constant 0 : index
    %c0_4 = arith.constant 0 : index
    %4 = vector.load %arg3[%c0_3, %c0_4] : memref<1x128xf32, #tpu.memory_space<vmem>>, vector<1x128xf32>
    %5 = vector.broadcast %4 : vector<1x128xf32> to vector<16x128xf32>
    %6 = arith.addf %3, %5 : vector<16x128xf32>
    %cst_5 = arith.constant 0.000000e+00 : f32
    %7 = vector.broadcast %cst_5 : f32 to vector<16x128xf32>
    %8 = arith.maximumf %6, %7 : vector<16x128xf32>
    %9 = arith.truncf %8 : vector<16x128xf32> to vector<16x128xbf16>
    %c0_6 = arith.constant 0 : index
    %c0_7 = arith.constant 0 : index
    %10 = vector.load %arg4[%c0_6, %c0_7] : memref<128x64xbf16, #tpu.memory_space<vmem>>, vector<128x64xbf16>
    %cst_8 = arith.constant dense<0.000000e+00> : vector<16x64xf32>
    %11 = tpu.matmul %9, %10, %cst_8 {dimension_numbers = #tpu.dot_dimension_numbers<[1], [0], [0], [1], [0, 0, 1, 1], [], []>} : vector<16x128xbf16>, vector<128x64xbf16>, vector<16x64xf32> -> vector<16x64xf32>
    %c0_9 = arith.constant 0 : index
    %c0_10 = arith.constant 0 : index
    %12 = vector.load %arg5[%c0_9, %c0_10] : memref<1x64xf32, #tpu.memory_space<vmem>>, vector<1x64xf32>
    %13 = vector.broadcast %12 : vector<1x64xf32> to vector<16x64xf32>
    %14 = arith.addf %11, %13 : vector<16x64xf32>
    %cst_11 = arith.constant 0.000000e+00 : f32
    %15 = vector.broadcast %cst_11 : f32 to vector<16x64xf32>
    %16 = arith.maximumf %14, %15 : vector<16x64xf32>
    %17 = arith.truncf %16 : vector<16x64xf32> to vector<16x64xbf16>
    %c0_12 = arith.constant 0 : index
    %c0_13 = arith.constant 0 : index
    %18 = vector.load %arg16[%c0_12, %c0_13] : memref<16x64xbf16, #tpu.memory_space<vmem>>, vector<16x64xbf16>
    tpu.vector_store %arg16[%c0_12, %c0_13], %17 {strides = array<i32>} : memref<16x64xbf16, #tpu.memory_space<vmem>>, vector<16x64xbf16>,
    %19 = arith.truncf %16 : vector<16x64xf32> to vector<16x64xbf16>
    %c0_14 = arith.constant 0 : index
    %c0_15 = arith.constant 0 : index
    %20 = vector.load %arg6[%c0_14, %c0_15] : memref<64x32xbf16, #tpu.memory_space<vmem>>, vector<64x32xbf16>
    %cst_16 = arith.constant dense<0.000000e+00> : vector<16x32xf32>
    %21 = tpu.matmul %19, %20, %cst_16 {dimension_numbers = #tpu.dot_dimension_numbers<[1], [0], [0], [1], [0, 0, 1, 1], [], []>} : vector<16x64xbf16>, vector<64x32xbf16>, vector<16x32xf32> -> vector<16x32xf32>
    %c0_17 = arith.constant 0 : index
    %c0_18 = arith.constant 0 : index
    %22 = vector.load %arg7[%c0_17, %c0_18] : memref<1x32xf32, #tpu.memory_space<vmem>>, vector<1x32xf32>
    %23 = vector.broadcast %22 : vector<1x32xf32> to vector<16x32xf32>
    %24 = arith.addf %21, %23 : vector<16x32xf32>
    %cst_19 = arith.constant 0.000000e+00 : f32
    %25 = vector.broadcast %cst_19 : f32 to vector<16x32xf32>
    %26 = arith.maximumf %24, %25 : vector<16x32xf32>
    %27 = arith.truncf %26 : vector<16x32xf32> to vector<16x32xbf16>
    %c0_20 = arith.constant 0 : index
    %c0_21 = arith.constant 0 : index
    %28 = vector.load %arg8[%c0_20, %c0_21] : memref<32x2xbf16, #tpu.memory_space<vmem>>, vector<32x2xbf16>
    %cst_22 = arith.constant dense<0.000000e+00> : vector<16x2xf32>
    %29 = tpu.matmul %27, %28, %cst_22 {dimension_numbers = #tpu.dot_dimension_numbers<[1], [0], [0], [1], [0, 0, 1, 1], [], []>} : vector<16x32xbf16>, vector<32x2xbf16>, vector<16x2xf32> -> vector<16x2xf32>
    %c0_23 = arith.constant 0 : index
    %c0_24 = arith.constant 0 : index
    %30 = vector.load %arg9[%c0_23, %c0_24] : memref<1x2xf32, #tpu.memory_space<vmem>>, vector<1x2xf32>
    %31 = vector.broadcast %30 : vector<1x2xf32> to vector<16x2xf32>
    %32 = arith.addf %29, %31 : vector<16x2xf32>
    %c0_25 = arith.constant 0 : index
    %c0_26 = arith.constant 0 : index
    %33 = vector.load %arg14[%c0_25, %c0_26] : memref<16x2xf32, #tpu.memory_space<vmem>>, vector<16x2xf32>
    tpu.vector_store %arg14[%c0_25, %c0_26], %32 {strides = array<i32>} : memref<16x2xf32, #tpu.memory_space<vmem>>, vector<16x2xf32>,
    %c0_27 = arith.constant 0 : index
    %c0_28 = arith.constant 0 : index
    %34 = vector.load %arg10[%c0_27, %c0_28] : memref<64x32xbf16, #tpu.memory_space<vmem>>, vector<64x32xbf16>
    %cst_29 = arith.constant dense<0.000000e+00> : vector<16x32xf32>
    %35 = tpu.matmul %19, %34, %cst_29 {dimension_numbers = #tpu.dot_dimension_numbers<[1], [0], [0], [1], [0, 0, 1, 1], [], []>} : vector<16x64xbf16>, vector<64x32xbf16>, vector<16x32xf32> -> vector<16x32xf32>
    %c0_30 = arith.constant 0 : index
    %c0_31 = arith.constant 0 : index
    %36 = vector.load %arg11[%c0_30, %c0_31] : memref<1x32xf32, #tpu.memory_space<vmem>>, vector<1x32xf32>
    %37 = vector.broadcast %36 : vector<1x32xf32> to vector<16x32xf32>
    %38 = arith.addf %35, %37 : vector<16x32xf32>
    %cst_32 = arith.constant 0.000000e+00 : f32
    %39 = vector.broadcast %cst_32 : f32 to vector<16x32xf32>
    %40 = arith.maximumf %38, %39 : vector<16x32xf32>
    %41 = arith.truncf %40 : vector<16x32xf32> to vector<16x32xbf16>
    %c0_33 = arith.constant 0 : index
    %c0_34 = arith.constant 0 : index
    %42 = vector.load %arg12[%c0_33, %c0_34] : memref<32x4xbf16, #tpu.memory_space<vmem>>, vector<32x4xbf16>
    %cst_35 = arith.constant dense<0.000000e+00> : vector<16x4xf32>
    %43 = tpu.matmul %41, %42, %cst_35 {dimension_numbers = #tpu.dot_dimension_numbers<[1], [0], [0], [1], [0, 0, 1, 1], [], []>} : vector<16x32xbf16>, vector<32x4xbf16>, vector<16x4xf32> -> vector<16x4xf32>
    %c0_36 = arith.constant 0 : index
    %c0_37 = arith.constant 0 : index
    %44 = vector.load %arg13[%c0_36, %c0_37] : memref<1x4xf32, #tpu.memory_space<vmem>>, vector<1x4xf32>
    %45 = vector.broadcast %44 : vector<1x4xf32> to vector<16x4xf32>
    %46 = arith.addf %43, %45 : vector<16x4xf32>
    %cst_38 = arith.constant dense<0xFF800000> : vector<16xf32>
    %47 = vector.multi_reduction <maximumf>, %46, %cst_38 [1] : vector<16x4xf32> to vector<16xf32>
    %48 = vector.shape_cast %47 : vector<16xf32> to vector<16x1xf32>
    %49 = vector.broadcast %48 : vector<16x1xf32> to vector<16x4xf32>
    %50 = arith.subf %46, %49 : vector<16x4xf32>
    %51 = math.exp %50 : vector<16x4xf32>
    %cst_39 = arith.constant dense<0.000000e+00> : vector<16xf32>
    %52 = vector.multi_reduction <add>, %51, %cst_39 [1] : vector<16x4xf32> to vector<16xf32>
    %53 = vector.shape_cast %52 : vector<16xf32> to vector<16x1xf32>
    %54 = math.log %53 : vector<16x1xf32>
    %55 = arith.addf %54, %48 : vector<16x1xf32>
    %56 = vector.broadcast %55 : vector<16x1xf32> to vector<16x4xf32>
    %57 = arith.subf %46, %56 : vector<16x4xf32>
    %c0_40 = arith.constant 0 : index
    %c0_41 = arith.constant 0 : index
    %58 = vector.load %arg15[%c0_40, %c0_41] : memref<16x4xf32, #tpu.memory_space<vmem>>, vector<16x4xf32>
    tpu.vector_store %arg15[%c0_40, %c0_41], %57 {strides = array<i32>} : memref<16x4xf32, #tpu.memory_space<vmem>>, vector<16x4xf32>,
    return
  }
  func.func @transform_0(%arg0: i32) -> (i32, i32) {
    %c0_i32 = arith.constant 0 : i32
    %c0_i32_0 = arith.constant 0 : i32
    return %arg0, %c0_i32 : i32, i32
  }
  func.func @transform_1(%arg0: i32) -> (i32, i32) {
    %c0_i32 = arith.constant 0 : i32
    %c0_i32_0 = arith.constant 0 : i32
    %c0_i32_1 = arith.constant 0 : i32
    return %c0_i32, %c0_i32_0 : i32, i32
  }
  func.func @transform_2(%arg0: i32) -> (i32, i32) {
    %c0_i32 = arith.constant 0 : i32
    %c0_i32_0 = arith.constant 0 : i32
    %c0_i32_1 = arith.constant 0 : i32
    return %c0_i32, %c0_i32_0 : i32, i32
  }
  func.func @transform_3(%arg0: i32) -> (i32, i32) {
    %c0_i32 = arith.constant 0 : i32
    %c0_i32_0 = arith.constant 0 : i32
    %c0_i32_1 = arith.constant 0 : i32
    return %c0_i32, %c0_i32_0 : i32, i32
  }
  func.func @transform_4(%arg0: i32) -> (i32, i32) {
    %c0_i32 = arith.constant 0 : i32
    %c0_i32_0 = arith.constant 0 : i32
    %c0_i32_1 = arith.constant 0 : i32
    return %c0_i32, %c0_i32_0 : i32, i32
  }
  func.func @transform_5(%arg0: i32) -> (i32, i32) {
    %c0_i32 = arith.constant 0 : i32
    %c0_i32_0 = arith.constant 0 : i32
    %c0_i32_1 = arith.constant 0 : i32
    return %c0_i32, %c0_i32_0 : i32, i32
  }
  func.func @transform_6(%arg0: i32) -> (i32, i32) {
    %c0_i32 = arith.constant 0 : i32
    %c0_i32_0 = arith.constant 0 : i32
    %c0_i32_1 = arith.constant 0 : i32
    return %c0_i32, %c0_i32_0 : i32, i32
  }
  func.func @transform_7(%arg0: i32) -> (i32, i32) {
    %c0_i32 = arith.constant 0 : i32
    %c0_i32_0 = arith.constant 0 : i32
    %c0_i32_1 = arith.constant 0 : i32
    return %c0_i32, %c0_i32_0 : i32, i32
  }
  func.func @transform_8(%arg0: i32) -> (i32, i32) {
    %c0_i32 = arith.constant 0 : i32
    %c0_i32_0 = arith.constant 0 : i32
    %c0_i32_1 = arith.constant 0 : i32
    return %c0_i32, %c0_i32_0 : i32, i32
  }
  func.func @transform_9(%arg0: i32) -> (i32, i32) {
    %c0_i32 = arith.constant 0 : i32
    %c0_i32_0 = arith.constant 0 : i32
    %c0_i32_1 = arith.constant 0 : i32
    return %c0_i32, %c0_i32_0 : i32, i32
  }
  func.func @transform_10(%arg0: i32) -> (i32, i32) {
    %c0_i32 = arith.constant 0 : i32
    %c0_i32_0 = arith.constant 0 : i32
    %c0_i32_1 = arith.constant 0 : i32
    return %c0_i32, %c0_i32_0 : i32, i32
  }
  func.func @transform_11(%arg0: i32) -> (i32, i32) {
    %c0_i32 = arith.constant 0 : i32
    %c0_i32_0 = arith.constant 0 : i32
    %c0_i32_1 = arith.constant 0 : i32
    return %c0_i32, %c0_i32_0 : i32, i32
  }
  func.func @transform_12(%arg0: i32) -> (i32, i32) {
    %c0_i32 = arith.constant 0 : i32
    %c0_i32_0 = arith.constant 0 : i32
    %c0_i32_1 = arith.constant 0 : i32
    return %c0_i32, %c0_i32_0 : i32, i32
  }
  func.func @transform_13(%arg0: i32) -> (i32, i32) {
    %c0_i32 = arith.constant 0 : i32
    %c0_i32_0 = arith.constant 0 : i32
    return %arg0, %c0_i32 : i32, i32
  }
  func.func @transform_14(%arg0: i32) -> (i32, i32) {
    %c0_i32 = arith.constant 0 : i32
    %c0_i32_0 = arith.constant 0 : i32
    return %arg0, %c0_i32 : i32, i32
  }
  func.func @transform_15(%arg0: i32) -> (i32, i32) {
    %c0_i32 = arith.constant 0 : i32
    %c0_i32_0 = arith.constant 0 : i32
    return %arg0, %c0_i32 : i32, i32
  }
}

</mosaic_0001>

<llo_original>
// kernel: dann_forward.1
$region0: #{dann_forward.1}
  #allocation0 [shape = 'u32[]', space=smem, size = 0x4, offset = 0x4, fixed_abs, tag = 'smem constant byte address 0x4 - core index']
  #allocation1 [shape = 'u32[72,128]{1,0:T(1,128)}', space=vmem, size = 0x9000, scoped, tag = 'internal scratch']
  %s0 = inlined_call_operand.vmem [shape: f32[16,32], index: 0, kind: input, shape index: {}]
  %s1 = inlined_call_operand.vmem [shape: bf16[32,128], index: 1, kind: input, shape index: {}]
  %s2 = inlined_call_operand.vmem [shape: f32[1,128], index: 2, kind: input, shape index: {}]
  %s3 = inlined_call_operand.vmem [shape: bf16[128,64], index: 3, kind: input, shape index: {}]
  %s4 = inlined_call_operand.vmem [shape: f32[1,64], index: 4, kind: input, shape index: {}]
  %s5 = inlined_call_operand.vmem [shape: bf16[64,32], index: 5, kind: input, shape index: {}]
  %s6 = inlined_call_operand.vmem [shape: f32[1,32], index: 6, kind: input, shape index: {}]
  %s7 = inlined_call_operand.vmem [shape: bf16[32,2], index: 7, kind: input, shape index: {}]
  %s8 = inlined_call_operand.vmem [shape: f32[1,2], index: 8, kind: input, shape index: {}]
  %s9 = inlined_call_operand.vmem [shape: bf16[64,32], index: 9, kind: input, shape index: {}]
  %s10 = inlined_call_operand.vmem [shape: f32[1,32], index: 10, kind: input, shape index: {}]
  %s11 = inlined_call_operand.vmem [shape: bf16[32,4], index: 11, kind: input, shape index: {}]
  %s12 = inlined_call_operand.vmem [shape: f32[1,4], index: 12, kind: input, shape index: {}]
  %s13 = inlined_call_operand.vmem [shape: f32[16,2], index: 13, kind: output, shape index: {0}]
  %s14 = inlined_call_operand.vmem [shape: f32[16,4], index: 14, kind: output, shape index: {1}]
  %s15 = inlined_call_operand.hbm [shape: bf16[16,64], index: 15, kind: output, shape index: {2}]
  %16 = xla_tuple %s13, %s14, %s15
  %s17 = sld [smem:[#allocation0]]
  $region78: #{dann_forward.1} parent=0
    _
  %s19 = ssub.s32 1, %s17
  %s20 = scalar_select 0, %s19, %s17
  $region1: #{dann_forward.1} parent=0
    #allocation2 [shape = 'u8[4096]{0}', space=vmem, size = 0x1000, scoped, tag = 'output window, operand 2, single buffered']
    #allocation3 [shape = 's32[1]{0}', space=sflag, size = 0x4, scoped, tag = 'scoped memory for dann_forward.1']
    %21 = vsyncpa [#allocation3], 0
    // Predicated region
    $region2: #{dann_forward.1} parent=1 // pred_check
      _
    $region3: #{dann_forward.1} parent=1 // pred_check_branch
      %23 = sbr.rel (0) target = $region5
    $region4: #{dann_forward.1} parent=1 // pred_region
      _
    $region5: #{dann_forward.1} parent=1 // pred_fallthru
      _
    // Predicated region
    $region6: #{dann_forward.1} parent=1 // pred_check
      _
    $region7: #{dann_forward.1} parent=1 // pred_check_branch
      %25 = sbr.rel (0) target = $region9
    $region8: #{dann_forward.1} parent=1 // pred_region
      _
    $region9: #{dann_forward.1} parent=1 // pred_fallthru
      _
    // Predicated region
    $region10: #{dann_forward.1} parent=1 // pred_check
      _
    $region11: #{dann_forward.1} parent=1 // pred_check_branch
      %27 = sbr.rel (0) target = $region13
    $region12: #{dann_forward.1} parent=1 // pred_region
      _
    $region13: #{dann_forward.1} parent=1 // pred_fallthru
      _
    // Predicated region
    $region14: #{dann_forward.1} parent=1 // pred_check
      _
    $region15: #{dann_forward.1} parent=1 // pred_check_branch
      %29 = sbr.rel (0) target = $region17
    $region16: #{dann_forward.1} parent=1 // pred_region
      _
    $region17: #{dann_forward.1} parent=1 // pred_fallthru
      _
    // Predicated region
    $region18: #{dann_forward.1} parent=1 // pred_check
      _
    $region19: #{dann_forward.1} parent=1 // pred_check_branch
      %31 = sbr.rel (0) target = $region21
    $region20: #{dann_forward.1} parent=1 // pred_region
      _
    $region21: #{dann_forward.1} parent=1 // pred_fallthru
      _
    // Predicated region
    $region22: #{dann_forward.1} parent=1 // pred_check
      _
    $region23: #{dann_forward.1} parent=1 // pred_check_branch
      %33 = sbr.rel (0) target = $region25
    $region24: #{dann_forward.1} parent=1 // pred_region
      _
    $region25: #{dann_forward.1} parent=1 // pred_fallthru
      _
    // Predicated region
    $region26: #{dann_forward.1} parent=1 // pred_check
      _
    $region27: #{dann_forward.1} parent=1 // pred_check_branch
      %35 = sbr.rel (0) target = $region29
    $region28: #{dann_forward.1} parent=1 // pred_region
      _
    $region29: #{dann_forward.1} parent=1 // pred_fallthru
      _
    // Predicated region
    $region30: #{dann_forward.1} parent=1 // pred_check
      _
    $region31: #{dann_forward.1} parent=1 // pred_check_branch
      %37 = sbr.rel (0) target = $region33
    $region32: #{dann_forward.1} parent=1 // pred_region
      _
    $region33: #{dann_forward.1} parent=1 // pred_fallthru
      _
    // Predicated region
    $region34: #{dann_forward.1} parent=1 // pred_check
      _
    $region35: #{dann_forward.1} parent=1 // pred_check_branch
      %39 = sbr.rel (0) target = $region37
    $region36: #{dann_forward.1} parent=1 // pred_region
      _
    $region37: #{dann_forward.1} parent=1 // pred_fallthru
      _
    // Predicated region
    $region38: #{dann_forward.1} parent=1 // pred_check
      _
    $region39: #{dann_forward.1} parent=1 // pred_check_branch
      %41 = sbr.rel (0) target = $region41
    $region40: #{dann_forward.1} parent=1 // pred_region
      _
    $region41: #{dann_forward.1} parent=1 // pred_fallthru
      _
    // Predicated region
    $region42: #{dann_forward.1} parent=1 // pred_check
      _
    $region43: #{dann_forward.1} parent=1 // pred_check_branch
      %43 = sbr.rel (0) target = $region45
    $region44: #{dann_forward.1} parent=1 // pred_region
      _
    $region45: #{dann_forward.1} parent=1 // pred_fallthru
      _
    // Predicated region
    $region46: #{dann_forward.1} parent=1 // pred_check
      _
    $region47: #{dann_forward.1} parent=1 // pred_check_branch
      %45 = sbr.rel (0) target = $region49
    $region48: #{dann_forward.1} parent=1 // pred_region
      _
    $region49: #{dann_forward.1} parent=1 // pred_fallthru
      _
    // Predicated region
    $region50: #{dann_forward.1} parent=1 // pred_check
      _
    $region51: #{dann_forward.1} parent=1 // pred_check_branch
      %47 = sbr.rel (0) target = $region53
    $region52: #{dann_forward.1} parent=1 // pred_region
      _
    $region53: #{dann_forward.1} parent=1 // pred_fallthru
      _
    %v49 = vld [vmem:[%s1] sm:$0xf]
    %v50 = vld [vmem:[%s1 + $0x4] sm:$0xf]
    %v51 = vld [vmem:[%s1 + $0x8] sm:$0xf]
    %v52 = vld [vmem:[%s1 + $0xc] sm:$0xf]
    %v53 = vld [vmem:[%s0] sm:$0xff]
    %v54 = vld [vmem:[%s0 + $0x8] sm:$0xff]
    %v55 = vpack.c.bf16 %v54, %v53
    %v56 = vld [vmem:[%s2] sm:$0x1]
    %v58 = vperm.slane %v56, 0
    %v64 = vunpack.c.l.b16 %v49
    %v65 = vunpack.c.l.b16 %v50
    %v66 = vunpack.c.l.b16 %v51
    %v67 = vunpack.c.l.b16 %v52
    %v68 = vpack.c.b16 %v65, %v64
    %v69 = vpack.c.b16 %v67, %v66
    %vm72 = vcmask 261120
    %v74 = vsel %vm72, %v55, 0
    %76 = vmatpush.bf16.msra.mxu0 0
    %77 = vmatpush.bf16.msra.mxu0 0
    %78 = vmatpush.bf16.msra.mxu0 0
    %79 = vmatpush.bf16.msra.mxu0 0
    %80 = vmatpush.bf16.msra.mxu0 0
    %81 = vmatpush.bf16.msra.mxu0 0
    %82 = vmatpush.bf16.msra.mxu0 %v69
    %83 = vmatpush.bf16.msra.mxu0 %v68
    %84 = vmatmul.bf16.gmra.mxu0 %v74
    %v85 = vpop.f32.mrf.mxu0
    %v86 = vadd.f32 %v58, %v85
    %v87 = vpop.f32.mrf.mxu0
    %v88 = vadd.f32 %v58, %v87
    %89 = vdwg.mxu0
    %v90 = vmax.f32 %v86, 0.0
    %v91 = vmax.f32 %v88, 0.0
    %v92 = vpack.c.bf16 %v91, %v90
    %v93 = vld [vmem:[%s3] sm:$0xf]
    %v94 = vld [vmem:[%s3 + $0x4] sm:$0xf]
    %v95 = vld [vmem:[%s3 + $0x8] sm:$0xf]
    %v96 = vld [vmem:[%s3 + $0xc] sm:$0xf]
    %v97 = vld [vmem:[%s3 + $0x10] sm:$0xf]
    %v98 = vld [vmem:[%s3 + $0x14] sm:$0xf]
    %v99 = vld [vmem:[%s3 + $0x18] sm:$0xf]
    %v100 = vld [vmem:[%s3 + $0x1c] sm:$0xf]
    %v101 = vld [vmem:[%s3 + $0x20] sm:$0xf]
    %v102 = vld [vmem:[%s3 + $0x24] sm:$0xf]
    %v103 = vld [vmem:[%s3 + $0x28] sm:$0xf]
    %v104 = vld [vmem:[%s3 + $0x2c] sm:$0xf]
    %v105 = vld [vmem:[%s3 + $0x30] sm:$0xf]
    %v106 = vld [vmem:[%s3 + $0x34] sm:$0xf]
    %v107 = vld [vmem:[%s3 + $0x38] sm:$0xf]
    %v108 = vld [vmem:[%s3 + $0x3c] sm:$0xf]
    %v109 = vld [vmem:[%s4] sm:$0x1]
    %v111 = vperm.slane %v109, 0
    %v129 = vunpack.c.l.b16 %v93
    %v130 = vunpack.c.l.b16 %v94
    %v131 = vunpack.c.l.b16 %v95
    %v132 = vunpack.c.l.b16 %v96
    %v133 = vunpack.c.l.b16 %v97
    %v134 = vunpack.c.l.b16 %v98
    %v135 = vunpack.c.l.b16 %v99
    %v136 = vunpack.c.l.b16 %v100
    %v137 = vunpack.c.l.b16 %v101
    %v138 = vunpack.c.l.b16 %v102
    %v139 = vunpack.c.l.b16 %v103
    %v140 = vunpack.c.l.b16 %v104
    %v141 = vunpack.c.l.b16 %v105
    %v142 = vunpack.c.l.b16 %v106
    %v143 = vunpack.c.l.b16 %v107
    %v144 = vunpack.c.l.b16 %v108
    %v145 = vpack.c.b16 %v130, %v129
    %v146 = vpack.c.b16 %v132, %v131
    %v147 = vpack.c.b16 %v134, %v133
    %v148 = vpack.c.b16 %v136, %v135
    %v149 = vpack.c.b16 %v138, %v137
    %v150 = vpack.c.b16 %v140, %v139
    %v151 = vpack.c.b16 %v142, %v141
    %v152 = vpack.c.b16 %v144, %v143
    %161 = vmatpush.bf16.msra.mxu0 %v152
    %162 = vmatpush.bf16.msra.mxu0 %v151
    %163 = vmatpush.bf16.msra.mxu0 %v150
    %164 = vmatpush.bf16.msra.mxu0 %v149
    %165 = vmatpush.bf16.msra.mxu0 %v148
    %166 = vmatpush.bf16.msra.mxu0 %v147
    %167 = vmatpush.bf16.msra.mxu0 %v146
    %168 = vmatpush.bf16.msra.mxu0 %v145
    %169 = vmatmul.bf16.gmra.mxu0 %v92
    %v170 = vpop.f32.mrf.mxu0
    %v171 = vadd.f32 %v111, %v170
    %v172 = vpop.f32.mrf.mxu0
    %v173 = vadd.f32 %v111, %v172
    %174 = vdwg.mxu0
    %v175 = vmax.f32 %v171, 0.0
    %v176 = vmax.f32 %v173, 0.0
    %v177 = vpack.c.bf16 %v175, %v175
    %v178 = vpack.c.bf16 %v176, %v176
    %vm179 = vcmask 519168
    %180 = vst.msk [vmem:[#allocation2] sm:$0xf] %vm179, %v177
    %181 = vst.msk [vmem:[#allocation2 + $0x4] sm:$0xf] %vm179, %v178
    %v182 = vld [vmem:[%s5] sm:$0xf]
    %v183 = vld [vmem:[%s5 + $0x4] sm:$0xf]
    %v184 = vld [vmem:[%s5 + $0x8] sm:$0xf]
    %v185 = vld [vmem:[%s5 + $0xc] sm:$0xf]
    %v186 = vld [vmem:[%s5 + $0x10] sm:$0xf]
    %v187 = vld [vmem:[%s5 + $0x14] sm:$0xf]
    %v188 = vld [vmem:[%s5 + $0x18] sm:$0xf]
    %v189 = vld [vmem:[%s5 + $0x1c] sm:$0xf]
    %v190 = vld [vmem:[%s6] sm:$0x1]
    %v192 = vperm.slane %v190, 0
    %v196 = vunpack.c.l.b16 %v177
    %v197 = vunpack.c.l.b16 %v178
    %v198 = vpack.c.b16 %v197, %v196
    %v207 = vunpack.c.l.b16 %v182
    %v208 = vunpack.c.l.b16 %v183
    %v209 = vunpack.c.l.b16 %v184
    %v210 = vunpack.c.l.b16 %v185
    %v211 = vunpack.c.l.b16 %v186
    %v212 = vunpack.c.l.b16 %v187
    %v213 = vunpack.c.l.b16 %v188
    %v214 = vunpack.c.l.b16 %v189
    %v215 = vpack.c.b16 %v208, %v207
    %v216 = vpack.c.b16 %v210, %v209
    %v217 = vpack.c.b16 %v212, %v211
    %v218 = vpack.c.b16 %v214, %v213
    %vm223 = vcmask 523264
    %v225 = vsel %vm223, %v198, 0
    %227 = vmatpush.bf16.msra.mxu0 0
    %228 = vmatpush.bf16.msra.mxu0 0
    %229 = vmatpush.bf16.msra.mxu0 0
    %230 = vmatpush.bf16.msra.mxu0 0
    %231 = vmatpush.bf16.msra.mxu0 %v218
    %232 = vmatpush.bf16.msra.mxu0 %v217
    %233 = vmatpush.bf16.msra.mxu0 %v216
    %234 = vmatpush.bf16.msra.mxu0 %v215
    %235 = vmatmul.bf16.gmra.mxu0 %v225
    %v236 = vpop.f32.mrf.mxu0
    %v237 = vadd.f32 %v192, %v236
    %v238 = vpop.f32.mrf.mxu0
    %v239 = vadd.f32 %v192, %v238
    %240 = vdwg.mxu0
    %v241 = vmax.f32 %v237, 0.0
    %v242 = vmax.f32 %v239, 0.0
    %v243 = vpack.c.bf16 %v242, %v241
    %v244 = vld [vmem:[%s7] sm:$0xf]
    %v245 = vld [vmem:[%s7 + $0x4] sm:$0xf]
    %v246 = vld [vmem:[%s7 + $0x8] sm:$0xf]
    %v247 = vld [vmem:[%s7 + $0xc] sm:$0xf]
    %v248 = vld [vmem:[%s8] sm:$0x1]
    %v250 = vperm.slane %v248, 0
    %v256 = vunpack.c.l.b16 %v244
    %v257 = vunpack.c.l.b16 %v245
    %v258 = vunpack.c.l.b16 %v246
    %v259 = vunpack.c.l.b16 %v247
    %v260 = vpack.c.b16 %v257, %v256
    %v261 = vpack.c.b16 %v259, %v258
    %v265 = vsel %vm72, %v243, 0
    %267 = vmatpush.bf16.msra.mxu0 0
    %268 = vmatpush.bf16.msra.mxu0 0
    %269 = vmatpush.bf16.msra.mxu0 0
    %270 = vmatpush.bf16.msra.mxu0 0
    %271 = vmatpush.bf16.msra.mxu0 0
    %272 = vmatpush.bf16.msra.mxu0 0
    %273 = vmatpush.bf16.msra.mxu0 %v261
    %274 = vmatpush.bf16.msra.mxu0 %v260
    %275 = vmatmul.bf16.gmra.mxu0 %v265
    %v276 = vpop.f32.mrf.mxu0
    %v277 = vadd.f32 %v250, %v276
    %v278 = vpop.f32.mrf.mxu0
    %v279 = vadd.f32 %v250, %v278
    %280 = vdwg.mxu0
    %vm281 = vcmask 15360
    %282 = vst.msk [vmem:[%s13] sm:$0xff] %vm281, %v277
    %283 = vst.msk [vmem:[%s13 + $0x8] sm:$0xff] %vm281, %v279
    %v284 = vld [vmem:[%s9] sm:$0xf]
    %v285 = vld [vmem:[%s9 + $0x4] sm:$0xf]
    %v286 = vld [vmem:[%s9 + $0x8] sm:$0xf]
    %v287 = vld [vmem:[%s9 + $0xc] sm:$0xf]
    %v288 = vld [vmem:[%s9 + $0x10] sm:$0xf]
    %v289 = vld [vmem:[%s9 + $0x14] sm:$0xf]
    %v290 = vld [vmem:[%s9 + $0x18] sm:$0xf]
    %v291 = vld [vmem:[%s9 + $0x1c] sm:$0xf]
    %v292 = vld [vmem:[%s10] sm:$0x1]
    %v294 = vperm.slane %v292, 0
    %v304 = vunpack.c.l.b16 %v284
    %v305 = vunpack.c.l.b16 %v285
    %v306 = vunpack.c.l.b16 %v286
    %v307 = vunpack.c.l.b16 %v287
    %v308 = vunpack.c.l.b16 %v288
    %v309 = vunpack.c.l.b16 %v289
    %v310 = vunpack.c.l.b16 %v290
    %v311 = vunpack.c.l.b16 %v291
    %v312 = vpack.c.b16 %v305, %v304
    %v313 = vpack.c.b16 %v307, %v306
    %v314 = vpack.c.b16 %v309, %v308
    %v315 = vpack.c.b16 %v311, %v310
    %320 = vmatpush.bf16.msra.mxu0 0
    %321 = vmatpush.bf16.msra.mxu0 0
    %322 = vmatpush.bf16.msra.mxu0 0
    %323 = vmatpush.bf16.msra.mxu0 0
    %324 = vmatpush.bf16.msra.mxu0 %v315
    %325 = vmatpush.bf16.msra.mxu0 %v314
    %326 = vmatpush.bf16.msra.mxu0 %v313
    %327 = vmatpush.bf16.msra.mxu0 %v312
    %328 = vmatmul.bf16.gmra.mxu0 %v225
    %v329 = vpop.f32.mrf.mxu0
    %v330 = vadd.f32 %v294, %v329
    %v331 = vpop.f32.mrf.mxu0
    %v332 = vadd.f32 %v294, %v331
    %333 = vdwg.mxu0
    %v334 = vmax.f32 %v330, 0.0
    %v335 = vmax.f32 %v332, 0.0
    %v336 = vpack.c.bf16 %v335, %v334
    %v337 = vld [vmem:[%s11] sm:$0xf]
    %v338 = vld [vmem:[%s11 + $0x4] sm:$0xf]
    %v339 = vld [vmem:[%s11 + $0x8] sm:$0xf]
    %v340 = vld [vmem:[%s11 + $0xc] sm:$0xf]
    %v341 = vld [vmem:[%s12] sm:$0x1]
    %v343 = vperm.slane %v341, 0
    %v349 = vunpack.c.l.b16 %v337
    %v350 = vunpack.c.l.b16 %v338
    %v351 = vunpack.c.l.b16 %v339
    %v352 = vunpack.c.l.b16 %v340
    %v353 = vpack.c.b16 %v350, %v349
    %v354 = vpack.c.b16 %v352, %v351
    %v358 = vsel %vm72, %v336, 0
    %360 = vmatpush.bf16.msra.mxu0 0
    %361 = vmatpush.bf16.msra.mxu0 0
    %362 = vmatpush.bf16.msra.mxu0 0
    %363 = vmatpush.bf16.msra.mxu0 0
    %364 = vmatpush.bf16.msra.mxu0 0
    %365 = vmatpush.bf16.msra.mxu0 0
    %366 = vmatpush.bf16.msra.mxu0 %v354
    %367 = vmatpush.bf16.msra.mxu0 %v353
    %368 = vmatmul.bf16.gmra.mxu0 %v358
    %v369 = vpop.f32.mrf.mxu0
    %v370 = vadd.f32 %v343, %v369
    %v371 = vpop.f32.mrf.mxu0
    %v372 = vadd.f32 %v343, %v371
    %373 = vdwg.mxu0
    %vm374 = vcmask 31744
    %v375 = vsel %vm374, %v370, -inf
    %376 = vmax.xlane.f32.xlu0 %v375
    %v377 = vpop.xlane.xlu0 %376
    %v378 = vsel %vm374, %v372, -inf
    %379 = vmax.xlane.f32.xlu0 %v378
    %v380 = vpop.xlane.xlu0 %379
    %v381 = vsub.f32 %v370, %v377
    %v382 = vsub.f32 %v372, %v380
    %v383 = vmul.f32 %v381, 1.442695
    %v384 = vpow.pop %v383
    %v385 = vmul.f32 %v382, 1.442695
    %v386 = vpow.pop %v385
    %v387 = vsel %vm374, %v384, 0.0
    %388 = vadd.xlane.f32.xlu0 %v387
    %v389 = vpop.xlane.xlu0 %388
    %v390 = vsel %vm374, %v386, 0.0
    %391 = vadd.xlane.f32.xlu0 %v390
    %v392 = vpop.xlane.xlu0 %391
    %v393 = vlog2.pop %v389
    %v394 = vmul.f32 %v393, 0.6931472
    %v395 = vlog2.pop %v392
    %v396 = vmul.f32 %v395, 0.6931472
    %v397 = vadd.f32 %v394, %v377
    %v398 = vadd.f32 %v396, %v380
    %v399 = vsub.f32 %v370, %v397
    %v400 = vsub.f32 %v372, %v398
    %401 = vst.msk [vmem:[%s14] sm:$0xff] %vm374, %v399
    %402 = vst.msk [vmem:[%s14 + $0x8] sm:$0xff] %vm374, %v400
    // Predicated region
    $region54: #{dann_forward.1} parent=1 // pred_check
      _
    $region55: #{dann_forward.1} parent=1 // pred_check_branch
      %404 = sbr.rel (0) target = $region57
    $region56: #{dann_forward.1} parent=1 // pred_region
      _
    $region57: #{dann_forward.1} parent=1 // pred_fallthru
      _
    // Predicated region
    $region58: #{dann_forward.1} parent=1 // pred_check
      _
    $region59: #{dann_forward.1} parent=1 // pred_check_branch
      %406 = sbr.rel (0) target = $region61
    $region60: #{dann_forward.1} parent=1 // pred_region
      _
    $region61: #{dann_forward.1} parent=1 // pred_fallthru
      _
    // Predicated region
    $region62: #{dann_forward.1} parent=1 // pred_check
      _
    $region63: #{dann_forward.1} parent=1 // pred_check_branch
      %408 = sbr.rel (0) target = $region65
    $region64: #{dann_forward.1} parent=1 // pred_region
      %410 = vsyncadd [#allocation3], 0
      %s411 = sshll.u32 [#allocation2], 4
      %s412 = int_to_ptr.vmem [resolvable:$true] %s411
      %s413 = sshll.u32 %s15, 4
      %s414 = int_to_ptr.hbm [resolvable:$true] %s413
      %419 = dma.vmem_to_hbm [thread:$0]  %s412, 128, %s414, [#allocation3], 64, 64, 4
    $region65: #{dann_forward.1} parent=1 // pred_fallthru
      _
    // Predicated region
    $region66: #{dann_forward.1} parent=1 // pred_check
      _
    $region67: #{dann_forward.1} parent=1 // pred_check_branch
      %421 = sbr.rel (0) target = $region69
    $region68: #{dann_forward.1} parent=1 // pred_region
      _
    $region69: #{dann_forward.1} parent=1 // pred_fallthru
      _
    // Predicated region
    $region70: #{dann_forward.1} parent=1 // pred_check
      _
    $region71: #{dann_forward.1} parent=1 // pred_check_branch
      %423 = sbr.rel (0) target = $region73
    $region72: #{dann_forward.1} parent=1 // pred_region
      _
    $region73: #{dann_forward.1} parent=1 // pred_fallthru
      _
    // Predicated region
    $region74: #{dann_forward.1} parent=1 // pred_check
      _
    $region75: #{dann_forward.1} parent=1 // pred_check_branch
      %425 = sbr.rel (0) target = $region77
    $region76: #{dann_forward.1} parent=1 // pred_region
      %427 = dma.done [#allocation3], 128
    $region77: #{dann_forward.1} parent=1 // pred_fallthru
      _
    %428 = vsyncpa [#allocation3], 1

</llo_original>
